<compile_context>
chip_gen: v7x
topology: tpu7x:2x2x1
jax: 0.10.0
libtpu: 0.0.40
codegen_flags: <defaults>
</compile_context>

<pallas_src>
import jax
import jax.numpy as jnp
from jax.experimental import pallas as pl
from jax.experimental.pallas import tpu as pltpu

# ----------------------------- model sizes -----------------------------
B, C, H, W = 2, 4, 16, 16
D_IN = C * H * W          # 1024
HIDDEN = 64
LATENT = 16               # latent_dim


def _round_up(x, m):
    return ((x + m - 1) // m) * m


# ----------------------------- Pallas kernel ---------------------------
def alphagan_fwd_kernel(x_ref,
                        we1_ref, be1_ref, we2_ref, be2_ref,   # encoder E
                        wg1_ref, bg1_ref, wg2_ref, bg2_ref,   # generator G
                        z_ref, xrec_ref):
    # ---- E(x): Linear -> ReLU -> Linear ---- (bf16 MXU matmuls, f32 accumulation)
    x = x_ref[...]                                                        # [TM, D_IN] bf16
    h = jnp.dot(x, we1_ref[...], preferred_element_type=jnp.float32) + be1_ref[...]
    h = jnp.maximum(h, 0.0).astype(jnp.bfloat16)
    z = jnp.dot(h, we2_ref[...], preferred_element_type=jnp.float32) + be2_ref[...]
    z_ref[...] = z                                                        # [TM, LATENT] f32

    # ---- G(z): Linear -> ReLU -> Linear ----
    g = jnp.dot(z.astype(jnp.bfloat16), wg1_ref[...],
                preferred_element_type=jnp.float32) + bg1_ref[...]
    g = jnp.maximum(g, 0.0).astype(jnp.bfloat16)
    x_rec = jnp.dot(g, wg2_ref[...], preferred_element_type=jnp.float32) + bg2_ref[...]
    xrec_ref[...] = x_rec                                                 # [TM, D_IN] f32


# ----------------------------- wrapper ----------------------------------
def alphagan_forward(x_nchw, params):
    """x_nchw: [B, C, H, W] float32. Returns (z [B, LATENT] f32, x_rec [B, C, H, W] f32)."""
    b = x_nchw.shape[0]
    we1, be1, we2, be2, wg1, bg1, wg2, bg2 = params

    # bf16 activations/weights; f32 biases (added post-accumulation).
    x_flat = x_nchw.reshape(b, -1).astype(jnp.bfloat16)                   # == torch x.view(B, -1)
    we1, we2, wg1, wg2 = (w.astype(jnp.bfloat16) for w in (we1, we2, wg1, wg2))

    # Pad batch rows to a bf16-sublane-friendly tile and grid over the batch axis.
    tm = min(128, _round_up(b, 16))
    b_pad = _round_up(b, tm)
    if b_pad != b:
        x_flat = jnp.pad(x_flat, ((0, b_pad - b), (0, 0)))
    grid = (b_pad // tm,)

    def tiled(shape):        # x / z / x_rec: tiled along the batch grid axis
        return pl.BlockSpec(shape, lambda i: (i, 0))

    def resident(shape):     # weights/biases: fetched once, resident across grid steps
        return pl.BlockSpec(shape, lambda i: (0, 0))

    in_specs = [
        tiled((tm, D_IN)),
        resident(we1.shape), resident(be1.shape),
        resident(we2.shape), resident(be2.shape),
        resident(wg1.shape), resident(bg1.shape),
        resident(wg2.shape), resident(bg2.shape),
    ]

    z_pad, xrec_pad = pl.pallas_call(
        alphagan_fwd_kernel,
        out_shape=(
            jax.ShapeDtypeStruct((b_pad, LATENT), jnp.float32),
            jax.ShapeDtypeStruct((b_pad, D_IN), jnp.float32),
        ),
        grid=grid,
        in_specs=in_specs,
        out_specs=(
            tiled((tm, LATENT)),
            tiled((tm, D_IN)),
        ),
        compiler_params=pltpu.CompilerParams(
            dimension_semantics=("parallel",),
        ),
    )(x_flat, we1, be1, we2, be2, wg1, bg1, wg2, bg2)

    return z_pad[:b], xrec_pad[:b].reshape(x_nchw.shape)


# ------------------------- deterministic params -------------------------
def init_params(key):
    ks = jax.random.split(key, 8)

    def linear(kw, kb, fan_in, fan_out):
        # PyTorch nn.Linear default init: W, b ~ U(-1/sqrt(fan_in), 1/sqrt(fan_in))
        bound = 1.0 / jnp.sqrt(fan_in)
        w = jax.random.uniform(kw, (fan_in, fan_out), jnp.float32, -bound, bound)
        b = jax.random.uniform(kb, (1, fan_out), jnp.float32, -bound, bound)
        return w, b

    we1, be1 = linear(ks[0], ks[1], D_IN, HIDDEN)
    we2, be2 = linear(ks[2], ks[3], HIDDEN, LATENT)
    wg1, bg1 = linear(ks[4], ks[5], LATENT, HIDDEN)
    wg2, bg2 = linear(ks[6], ks[7], HIDDEN, D_IN)
    return (we1, be1, we2, be2, wg1, bg1, wg2, bg2)


# ------------------------------- main -----------------------------------
if __name__ == "__main__":
    key = jax.random.PRNGKey(0)
    k_x, k_p = jax.random.split(key)

    x = jax.random.normal(k_x, (B, C, H, W), dtype=jnp.float32)  # NCHW input
    params = init_params(k_p)

    z, x_rec = jax.jit(alphagan_forward)(x, params)
    jax.block_until_ready((z, x_rec))

    # Pure-JAX reference of the same forward math with matching bf16/f32 dtype flow.
    we1, be1, we2, be2, wg1, bg1, wg2, bg2 = params
    we1b, we2b, wg1b, wg2b = (w.astype(jnp.bfloat16) for w in (we1, we2, wg1, wg2))
    xf = x.reshape(B, -1).astype(jnp.bfloat16)
    h_ref = jnp.maximum(
        jnp.dot(xf, we1b, preferred_element_type=jnp.float32) + be1, 0.0
    ).astype(jnp.bfloat16)
    z_ref = jnp.dot(h_ref, we2b, preferred_element_type=jnp.float32) + be2
    g_ref = jnp.maximum(
        jnp.dot(z_ref.astype(jnp.bfloat16), wg1b, preferred_element_type=jnp.float32) + bg1,
        0.0,
    ).astype(jnp.bfloat16)
    xr_ref = (jnp.dot(g_ref, wg2b, preferred_element_type=jnp.float32) + bg2
              ).reshape(B, C, H, W)

    assert z.shape == (B, LATENT) and x_rec.shape == (B, C, H, W)
    assert z.dtype == jnp.float32 and x_rec.dtype == jnp.float32
    assert jnp.allclose(z, z_ref, atol=1e-2, rtol=1e-2)
    assert jnp.allclose(x_rec, xr_ref, atol=1e-2, rtol=1e-2)

    # TODO(synk): training-loop methods (fit/_epoch, optimizers, D/C discriminator losses,
    # sample/generate modes using torch.randn) are host-side orchestration with autograd
    # and are not kernel work.
    print("KERNEL_OK")
</pallas_src>

<mosaic_0001>
module attributes {stable_mosaic.version = 11 : i64} {
  func.func @alphagan_fwd_kernel(%arg0: i32, %arg1: memref<16x1024xbf16, #tpu.memory_space<vmem>>, %arg2: memref<1024x64xbf16, #tpu.memory_space<vmem>>, %arg3: memref<1x64xf32, #tpu.memory_space<vmem>>, %arg4: memref<64x16xbf16, #tpu.memory_space<vmem>>, %arg5: memref<1x16xf32, #tpu.memory_space<vmem>>, %arg6: memref<16x64xbf16, #tpu.memory_space<vmem>>, %arg7: memref<1x64xf32, #tpu.memory_space<vmem>>, %arg8: memref<64x1024xbf16, #tpu.memory_space<vmem>>, %arg9: memref<1x1024xf32, #tpu.memory_space<vmem>>, %arg10: memref<16x16xf32, #tpu.memory_space<vmem>>, %arg11: memref<16x1024xf32, #tpu.memory_space<vmem>>) attributes {dimension_semantics = [#tpu.dimension_semantics<parallel>], iteration_bounds = array<i64: 1>, scalar_prefetch = 0 : i64, scratch_operands = 0 : i64, tpu.core_type = #tpu.core_type<tc>, window_params = [{transform_indices = @transform_0, window_bounds = array<i64: 16, 1024>}, {pipeline_mode = #tpu.pipeline_mode<synchronous>, transform_indices = @transform_1, window_bounds = array<i64: 1024, 64>}, {pipeline_mode = #tpu.pipeline_mode<synchronous>, transform_indices = @transform_2, window_bounds = array<i64: 1, 64>}, {pipeline_mode = #tpu.pipeline_mode<synchronous>, transform_indices = @transform_3, window_bounds = array<i64: 64, 16>}, {pipeline_mode = #tpu.pipeline_mode<synchronous>, transform_indices = @transform_4, window_bounds = array<i64: 1, 16>}, {pipeline_mode = #tpu.pipeline_mode<synchronous>, transform_indices = @transform_5, window_bounds = array<i64: 16, 64>}, {pipeline_mode = #tpu.pipeline_mode<synchronous>, transform_indices = @transform_6, window_bounds = array<i64: 1, 64>}, {pipeline_mode = #tpu.pipeline_mode<synchronous>, transform_indices = @transform_7, window_bounds = array<i64: 64, 1024>}, {pipeline_mode = #tpu.pipeline_mode<synchronous>, transform_indices = @transform_8, window_bounds = array<i64: 1, 1024>}, {transform_indices = @transform_9, window_bounds = array<i64: 16, 16>}, {transform_indices = @transform_10, window_bounds = array<i64: 16, 1024>}]} {
    %c0 = arith.constant 0 : index
    %c0_0 = arith.constant 0 : index
    %0 = vector.load %arg1[%c0, %c0_0] : memref<16x1024xbf16, #tpu.memory_space<vmem>>, vector<16x1024xbf16>
    %c0_1 = arith.constant 0 : index
    %c0_2 = arith.constant 0 : index
    %1 = vector.load %arg2[%c0_1, %c0_2] : memref<1024x64xbf16, #tpu.memory_space<vmem>>, vector<1024x64xbf16>
    %cst = arith.constant dense<0.000000e+00> : vector<16x64xf32>
    %2 = tpu.matmul %0, %1, %cst {dimension_numbers = #tpu.dot_dimension_numbers<[1], [0], [0], [1], [0, 0, 1, 1], [], []>} : vector<16x1024xbf16>, vector<1024x64xbf16>, vector<16x64xf32> -> vector<16x64xf32>
    %c0_3 = arith.constant 0 : index
    %c0_4 = arith.constant 0 : index
    %3 = vector.load %arg3[%c0_3, %c0_4] : memref<1x64xf32, #tpu.memory_space<vmem>>, vector<1x64xf32>
    %4 = vector.broadcast %3 : vector<1x64xf32> to vector<16x64xf32>
    %5 = arith.addf %2, %4 : vector<16x64xf32>
    %cst_5 = arith.constant 0.000000e+00 : f32
    %6 = vector.broadcast %cst_5 : f32 to vector<16x64xf32>
    %7 = arith.maximumf %5, %6 : vector<16x64xf32>
    %8 = arith.truncf %7 : vector<16x64xf32> to vector<16x64xbf16>
    %c0_6 = arith.constant 0 : index
    %c0_7 = arith.constant 0 : index
    %9 = vector.load %arg4[%c0_6, %c0_7] : memref<64x16xbf16, #tpu.memory_space<vmem>>, vector<64x16xbf16>
    %cst_8 = arith.constant dense<0.000000e+00> : vector<16x16xf32>
    %10 = tpu.matmul %8, %9, %cst_8 {dimension_numbers = #tpu.dot_dimension_numbers<[1], [0], [0], [1], [0, 0, 1, 1], [], []>} : vector<16x64xbf16>, vector<64x16xbf16>, vector<16x16xf32> -> vector<16x16xf32>
    %c0_9 = arith.constant 0 : index
    %c0_10 = arith.constant 0 : index
    %11 = vector.load %arg5[%c0_9, %c0_10] : memref<1x16xf32, #tpu.memory_space<vmem>>, vector<1x16xf32>
    %12 = vector.broadcast %11 : vector<1x16xf32> to vector<16x16xf32>
    %13 = arith.addf %10, %12 : vector<16x16xf32>
    %c0_11 = arith.constant 0 : index
    %c0_12 = arith.constant 0 : index
    %14 = vector.load %arg10[%c0_11, %c0_12] : memref<16x16xf32, #tpu.memory_space<vmem>>, vector<16x16xf32>
    tpu.vector_store %arg10[%c0_11, %c0_12], %13 {strides = array<i32>} : memref<16x16xf32, #tpu.memory_space<vmem>>, vector<16x16xf32>,
    %15 = arith.truncf %13 : vector<16x16xf32> to vector<16x16xbf16>
    %c0_13 = arith.constant 0 : index
    %c0_14 = arith.constant 0 : index
    %16 = vector.load %arg6[%c0_13, %c0_14] : memref<16x64xbf16, #tpu.memory_space<vmem>>, vector<16x64xbf16>
    %cst_15 = arith.constant dense<0.000000e+00> : vector<16x64xf32>
    %17 = tpu.matmul %15, %16, %cst_15 {dimension_numbers = #tpu.dot_dimension_numbers<[1], [0], [0], [1], [0, 0, 1, 1], [], []>} : vector<16x16xbf16>, vector<16x64xbf16>, vector<16x64xf32> -> vector<16x64xf32>
    %c0_16 = arith.constant 0 : index
    %c0_17 = arith.constant 0 : index
    %18 = vector.load %arg7[%c0_16, %c0_17] : memref<1x64xf32, #tpu.memory_space<vmem>>, vector<1x64xf32>
    %19 = vector.broadcast %18 : vector<1x64xf32> to vector<16x64xf32>
    %20 = arith.addf %17, %19 : vector<16x64xf32>
    %cst_18 = arith.constant 0.000000e+00 : f32
    %21 = vector.broadcast %cst_18 : f32 to vector<16x64xf32>
    %22 = arith.maximumf %20, %21 : vector<16x64xf32>
    %23 = arith.truncf %22 : vector<16x64xf32> to vector<16x64xbf16>
    %c0_19 = arith.constant 0 : index
    %c0_20 = arith.constant 0 : index
    %24 = vector.load %arg8[%c0_19, %c0_20] : memref<64x1024xbf16, #tpu.memory_space<vmem>>, vector<64x1024xbf16>
    %cst_21 = arith.constant dense<0.000000e+00> : vector<16x1024xf32>
    %25 = tpu.matmul %23, %24, %cst_21 {dimension_numbers = #tpu.dot_dimension_numbers<[1], [0], [0], [1], [0, 0, 1, 1], [], []>} : vector<16x64xbf16>, vector<64x1024xbf16>, vector<16x1024xf32> -> vector<16x1024xf32>
    %c0_22 = arith.constant 0 : index
    %c0_23 = arith.constant 0 : index
    %26 = vector.load %arg9[%c0_22, %c0_23] : memref<1x1024xf32, #tpu.memory_space<vmem>>, vector<1x1024xf32>
    %27 = vector.broadcast %26 : vector<1x1024xf32> to vector<16x1024xf32>
    %28 = arith.addf %25, %27 : vector<16x1024xf32>
    %c0_24 = arith.constant 0 : index
    %c0_25 = arith.constant 0 : index
    %29 = vector.load %arg11[%c0_24, %c0_25] : memref<16x1024xf32, #tpu.memory_space<vmem>>, vector<16x1024xf32>
    tpu.vector_store %arg11[%c0_24, %c0_25], %28 {strides = array<i32>} : memref<16x1024xf32, #tpu.memory_space<vmem>>, vector<16x1024xf32>,
    return
  }
  func.func @transform_0(%arg0: i32) -> (i32, i32) {
    %c0_i32 = arith.constant 0 : i32
    %c0_i32_0 = arith.constant 0 : i32
    return %arg0, %c0_i32 : i32, i32
  }
  func.func @transform_1(%arg0: i32) -> (i32, i32) {
    %c0_i32 = arith.constant 0 : i32
    %c0_i32_0 = arith.constant 0 : i32
    %c0_i32_1 = arith.constant 0 : i32
    return %c0_i32, %c0_i32_0 : i32, i32
  }
  func.func @transform_2(%arg0: i32) -> (i32, i32) {
    %c0_i32 = arith.constant 0 : i32
    %c0_i32_0 = arith.constant 0 : i32
    %c0_i32_1 = arith.constant 0 : i32
    return %c0_i32, %c0_i32_0 : i32, i32
  }
  func.func @transform_3(%arg0: i32) -> (i32, i32) {
    %c0_i32 = arith.constant 0 : i32
    %c0_i32_0 = arith.constant 0 : i32
    %c0_i32_1 = arith.constant 0 : i32
    return %c0_i32, %c0_i32_0 : i32, i32
  }
  func.func @transform_4(%arg0: i32) -> (i32, i32) {
    %c0_i32 = arith.constant 0 : i32
    %c0_i32_0 = arith.constant 0 : i32
    %c0_i32_1 = arith.constant 0 : i32
    return %c0_i32, %c0_i32_0 : i32, i32
  }
  func.func @transform_5(%arg0: i32) -> (i32, i32) {
    %c0_i32 = arith.constant 0 : i32
    %c0_i32_0 = arith.constant 0 : i32
    %c0_i32_1 = arith.constant 0 : i32
    return %c0_i32, %c0_i32_0 : i32, i32
  }
  func.func @transform_6(%arg0: i32) -> (i32, i32) {
    %c0_i32 = arith.constant 0 : i32
    %c0_i32_0 = arith.constant 0 : i32
    %c0_i32_1 = arith.constant 0 : i32
    return %c0_i32, %c0_i32_0 : i32, i32
  }
  func.func @transform_7(%arg0: i32) -> (i32, i32) {
    %c0_i32 = arith.constant 0 : i32
    %c0_i32_0 = arith.constant 0 : i32
    %c0_i32_1 = arith.constant 0 : i32
    return %c0_i32, %c0_i32_0 : i32, i32
  }
  func.func @transform_8(%arg0: i32) -> (i32, i32) {
    %c0_i32 = arith.constant 0 : i32
    %c0_i32_0 = arith.constant 0 : i32
    %c0_i32_1 = arith.constant 0 : i32
    return %c0_i32, %c0_i32_0 : i32, i32
  }
  func.func @transform_9(%arg0: i32) -> (i32, i32) {
    %c0_i32 = arith.constant 0 : i32
    %c0_i32_0 = arith.constant 0 : i32
    return %arg0, %c0_i32 : i32, i32
  }
  func.func @transform_10(%arg0: i32) -> (i32, i32) {
    %c0_i32 = arith.constant 0 : i32
    %c0_i32_0 = arith.constant 0 : i32
    return %arg0, %c0_i32 : i32, i32
  }
}

</mosaic_0001>

<llo_original>
// kernel: alphagan_forward.1
$region0: #{alphagan_forward.1}
  #allocation0 [shape = 'u32[]', space=smem, size = 0x4, offset = 0x4, fixed_abs, tag = 'smem constant byte address 0x4 - core index']
  #allocation1 [shape = 'u32[144,128]{1,0:T(1,128)}', space=vmem, size = 0x12000, scoped, tag = 'internal scratch']
  %s0 = inlined_call_operand.vmem [shape: bf16[16,1024], index: 0, kind: input, shape index: {}]
  %s1 = inlined_call_operand.vmem [shape: bf16[1024,64], index: 1, kind: input, shape index: {}]
  %s2 = inlined_call_operand.vmem [shape: f32[1,64], index: 2, kind: input, shape index: {}]
  %s3 = inlined_call_operand.vmem [shape: bf16[64,16], index: 3, kind: input, shape index: {}]
  %s4 = inlined_call_operand.vmem [shape: f32[1,16], index: 4, kind: input, shape index: {}]
  %s5 = inlined_call_operand.vmem [shape: bf16[16,64], index: 5, kind: input, shape index: {}]
  %s6 = inlined_call_operand.vmem [shape: f32[1,64], index: 6, kind: input, shape index: {}]
  %s7 = inlined_call_operand.vmem [shape: bf16[64,1024], index: 7, kind: input, shape index: {}]
  %s8 = inlined_call_operand.vmem [shape: f32[1,1024], index: 8, kind: input, shape index: {}]
  %s9 = inlined_call_operand.vmem [shape: f32[16,16], index: 9, kind: output, shape index: {0}]
  %s10 = inlined_call_operand.vmem [shape: f32[16,1024], index: 10, kind: output, shape index: {1}]
  %11 = xla_tuple %s9, %s10
  %s12 = sld [smem:[#allocation0]]
  $region54: #{alphagan_forward.1} parent=0
    _
  %s14 = ssub.s32 1, %s12
  %s15 = scalar_select 0, %s14, %s12
  // Predicated region
  $region2: #{alphagan_forward.1} parent=0 // pred_check
    _
  $region3: #{alphagan_forward.1} parent=0 // pred_check_branch
    %17 = sbr.rel (0) target = $region5
  $region4: #{alphagan_forward.1} parent=0 // pred_region
    _
  $region5: #{alphagan_forward.1} parent=0 // pred_fallthru
    _
  // Predicated region
  $region6: #{alphagan_forward.1} parent=0 // pred_check
    _
  $region7: #{alphagan_forward.1} parent=0 // pred_check_branch
    %19 = sbr.rel (0) target = $region9
  $region8: #{alphagan_forward.1} parent=0 // pred_region
    _
  $region9: #{alphagan_forward.1} parent=0 // pred_fallthru
    _
  // Predicated region
  $region10: #{alphagan_forward.1} parent=0 // pred_check
    _
  $region11: #{alphagan_forward.1} parent=0 // pred_check_branch
    %21 = sbr.rel (0) target = $region13
  $region12: #{alphagan_forward.1} parent=0 // pred_region
    _
  $region13: #{alphagan_forward.1} parent=0 // pred_fallthru
    _
  // Predicated region
  $region14: #{alphagan_forward.1} parent=0 // pred_check
    _
  $region15: #{alphagan_forward.1} parent=0 // pred_check_branch
    %23 = sbr.rel (0) target = $region17
  $region16: #{alphagan_forward.1} parent=0 // pred_region
    _
  $region17: #{alphagan_forward.1} parent=0 // pred_fallthru
    _
  // Predicated region
  $region18: #{alphagan_forward.1} parent=0 // pred_check
    _
  $region19: #{alphagan_forward.1} parent=0 // pred_check_branch
    %25 = sbr.rel (0) target = $region21
  $region20: #{alphagan_forward.1} parent=0 // pred_region
    _
  $region21: #{alphagan_forward.1} parent=0 // pred_fallthru
    _
  // Predicated region
  $region22: #{alphagan_forward.1} parent=0 // pred_check
    _
  $region23: #{alphagan_forward.1} parent=0 // pred_check_branch
    %27 = sbr.rel (0) target = $region25
  $region24: #{alphagan_forward.1} parent=0 // pred_region
    _
  $region25: #{alphagan_forward.1} parent=0 // pred_fallthru
    _
  // Predicated region
  $region26: #{alphagan_forward.1} parent=0 // pred_check
    _
  $region27: #{alphagan_forward.1} parent=0 // pred_check_branch
    %29 = sbr.rel (0) target = $region29
  $region28: #{alphagan_forward.1} parent=0 // pred_region
    _
  $region29: #{alphagan_forward.1} parent=0 // pred_fallthru
    _
  // Predicated region
  $region30: #{alphagan_forward.1} parent=0 // pred_check
    _
  $region31: #{alphagan_forward.1} parent=0 // pred_check_branch
    %31 = sbr.rel (0) target = $region33
  $region32: #{alphagan_forward.1} parent=0 // pred_region
    _
  $region33: #{alphagan_forward.1} parent=0 // pred_fallthru
    _
  // Predicated region
  $region34: #{alphagan_forward.1} parent=0 // pred_check
    _
  $region35: #{alphagan_forward.1} parent=0 // pred_check_branch
    %33 = sbr.rel (0) target = $region37
  $region36: #{alphagan_forward.1} parent=0 // pred_region
    _
  $region37: #{alphagan_forward.1} parent=0 // pred_fallthru
    _
  %v35 = vld [vmem:[%s0] sm:$0xff]
  %v36 = vld [vmem:[%s0 + $0x8] sm:$0xff]
  %v37 = vld [vmem:[%s0 + $0x10] sm:$0xff]
  %v38 = vld [vmem:[%s0 + $0x18] sm:$0xff]
  %v39 = vld [vmem:[%s0 + $0x20] sm:$0xff]
  %v40 = vld [vmem:[%s0 + $0x28] sm:$0xff]
  %v41 = vld [vmem:[%s0 + $0x30] sm:$0xff]
  %v42 = vld [vmem:[%s0 + $0x38] sm:$0xff]
  %v43 = vld [vmem:[%s1] sm:$0xf]
  %v44 = vld [vmem:[%s1 + $0x4] sm:$0xf]
  %v45 = vld [vmem:[%s1 + $0x8] sm:$0xf]
  %v46 = vld [vmem:[%s1 + $0xc] sm:$0xf]
  %v47 = vld [vmem:[%s1 + $0x10] sm:$0xf]
  %v48 = vld [vmem:[%s1 + $0x14] sm:$0xf]
  %v49 = vld [vmem:[%s1 + $0x18] sm:$0xf]
  %v50 = vld [vmem:[%s1 + $0x1c] sm:$0xf]
  %v51 = vld [vmem:[%s1 + $0x20] sm:$0xf]
  %v52 = vld [vmem:[%s1 + $0x24] sm:$0xf]
  %v53 = vld [vmem:[%s1 + $0x28] sm:$0xf]
  %v54 = vld [vmem:[%s1 + $0x2c] sm:$0xf]
  %v55 = vld [vmem:[%s1 + $0x30] sm:$0xf]
  %v56 = vld [vmem:[%s1 + $0x34] sm:$0xf]
  %v57 = vld [vmem:[%s1 + $0x38] sm:$0xf]
  %v58 = vld [vmem:[%s1 + $0x3c] sm:$0xf]
  %v59 = vld [vmem:[%s1 + $0x40] sm:$0xf]
  %v60 = vld [vmem:[%s1 + $0x44] sm:$0xf]
  %v61 = vld [vmem:[%s1 + $0x48] sm:$0xf]
  %v62 = vld [vmem:[%s1 + $0x4c] sm:$0xf]
  %v63 = vld [vmem:[%s1 + $0x50] sm:$0xf]
  %v64 = vld [vmem:[%s1 + $0x54] sm:$0xf]
  %v65 = vld [vmem:[%s1 + $0x58] sm:$0xf]
  %v66 = vld [vmem:[%s1 + $0x5c] sm:$0xf]
  %v67 = vld [vmem:[%s1 + $0x60] sm:$0xf]
  %v68 = vld [vmem:[%s1 + $0x64] sm:$0xf]
  %v69 = vld [vmem:[%s1 + $0x68] sm:$0xf]
  %v70 = vld [vmem:[%s1 + $0x6c] sm:$0xf]
  %v71 = vld [vmem:[%s1 + $0x70] sm:$0xf]
  %v72 = vld [vmem:[%s1 + $0x74] sm:$0xf]
  %v73 = vld [vmem:[%s1 + $0x78] sm:$0xf]
  %v74 = vld [vmem:[%s1 + $0x7c] sm:$0xf]
  %v75 = vld [vmem:[%s1 + $0x80] sm:$0xf]
  %v76 = vld [vmem:[%s1 + $0x84] sm:$0xf]
  %v77 = vld [vmem:[%s1 + $0x88] sm:$0xf]
  %v78 = vld [vmem:[%s1 + $0x8c] sm:$0xf]
  %v79 = vld [vmem:[%s1 + $0x90] sm:$0xf]
  %v80 = vld [vmem:[%s1 + $0x94] sm:$0xf]
  %v81 = vld [vmem:[%s1 + $0x98] sm:$0xf]
  %v82 = vld [vmem:[%s1 + $0x9c] sm:$0xf]
  %v83 = vld [vmem:[%s1 + $0xa0] sm:$0xf]
  %v84 = vld [vmem:[%s1 + $0xa4] sm:$0xf]
  %v85 = vld [vmem:[%s1 + $0xa8] sm:$0xf]
  %v86 = vld [vmem:[%s1 + $0xac] sm:$0xf]
  %v87 = vld [vmem:[%s1 + $0xb0] sm:$0xf]
  %v88 = vld [vmem:[%s1 + $0xb4] sm:$0xf]
  %v89 = vld [vmem:[%s1 + $0xb8] sm:$0xf]
  %v90 = vld [vmem:[%s1 + $0xbc] sm:$0xf]
  %v91 = vld [vmem:[%s1 + $0xc0] sm:$0xf]
  %v92 = vld [vmem:[%s1 + $0xc4] sm:$0xf]
  %v93 = vld [vmem:[%s1 + $0xc8] sm:$0xf]
  %v94 = vld [vmem:[%s1 + $0xcc] sm:$0xf]
  %v95 = vld [vmem:[%s1 + $0xd0] sm:$0xf]
  %v96 = vld [vmem:[%s1 + $0xd4] sm:$0xf]
  %v97 = vld [vmem:[%s1 + $0xd8] sm:$0xf]
  %v98 = vld [vmem:[%s1 + $0xdc] sm:$0xf]
  %v99 = vld [vmem:[%s1 + $0xe0] sm:$0xf]
  %v100 = vld [vmem:[%s1 + $0xe4] sm:$0xf]
  %v101 = vld [vmem:[%s1 + $0xe8] sm:$0xf]
  %v102 = vld [vmem:[%s1 + $0xec] sm:$0xf]
  %v103 = vld [vmem:[%s1 + $0xf0] sm:$0xf]
  %v104 = vld [vmem:[%s1 + $0xf4] sm:$0xf]
  %v105 = vld [vmem:[%s1 + $0xf8] sm:$0xf]
  %v106 = vld [vmem:[%s1 + $0xfc] sm:$0xf]
  %v107 = vld [vmem:[%s1 + $0x100] sm:$0xf]
  %v108 = vld [vmem:[%s1 + $0x104] sm:$0xf]
  %v109 = vld [vmem:[%s1 + $0x108] sm:$0xf]
  %v110 = vld [vmem:[%s1 + $0x10c] sm:$0xf]
  %v111 = vld [vmem:[%s1 + $0x110] sm:$0xf]
  %v112 = vld [vmem:[%s1 + $0x114] sm:$0xf]
  %v113 = vld [vmem:[%s1 + $0x118] sm:$0xf]
  %v114 = vld [vmem:[%s1 + $0x11c] sm:$0xf]
  %v115 = vld [vmem:[%s1 + $0x120] sm:$0xf]
  %v116 = vld [vmem:[%s1 + $0x124] sm:$0xf]
  %v117 = vld [vmem:[%s1 + $0x128] sm:$0xf]
  %v118 = vld [vmem:[%s1 + $0x12c] sm:$0xf]
  %v119 = vld [vmem:[%s1 + $0x130] sm:$0xf]
  %v120 = vld [vmem:[%s1 + $0x134] sm:$0xf]
  %v121 = vld [vmem:[%s1 + $0x138] sm:$0xf]
  %v122 = vld [vmem:[%s1 + $0x13c] sm:$0xf]
  %v123 = vld [vmem:[%s1 + $0x140] sm:$0xf]
  %v124 = vld [vmem:[%s1 + $0x144] sm:$0xf]
  %v125 = vld [vmem:[%s1 + $0x148] sm:$0xf]
  %v126 = vld [vmem:[%s1 + $0x14c] sm:$0xf]
  %v127 = vld [vmem:[%s1 + $0x150] sm:$0xf]
  %v128 = vld [vmem:[%s1 + $0x154] sm:$0xf]
  %v129 = vld [vmem:[%s1 + $0x158] sm:$0xf]
  %v130 = vld [vmem:[%s1 + $0x15c] sm:$0xf]
  %v131 = vld [vmem:[%s1 + $0x160] sm:$0xf]
  %v132 = vld [vmem:[%s1 + $0x164] sm:$0xf]
  %v133 = vld [vmem:[%s1 + $0x168] sm:$0xf]
  %v134 = vld [vmem:[%s1 + $0x16c] sm:$0xf]
  %v135 = vld [vmem:[%s1 + $0x170] sm:$0xf]
  %v136 = vld [vmem:[%s1 + $0x174] sm:$0xf]
  %v137 = vld [vmem:[%s1 + $0x178] sm:$0xf]
  %v138 = vld [vmem:[%s1 + $0x17c] sm:$0xf]
  %v139 = vld [vmem:[%s1 + $0x180] sm:$0xf]
  %v140 = vld [vmem:[%s1 + $0x184] sm:$0xf]
  %v141 = vld [vmem:[%s1 + $0x188] sm:$0xf]
  %v142 = vld [vmem:[%s1 + $0x18c] sm:$0xf]
  %v143 = vld [vmem:[%s1 + $0x190] sm:$0xf]
  %v144 = vld [vmem:[%s1 + $0x194] sm:$0xf]
  %v145 = vld [vmem:[%s1 + $0x198] sm:$0xf]
  %v146 = vld [vmem:[%s1 + $0x19c] sm:$0xf]
  %v147 = vld [vmem:[%s1 + $0x1a0] sm:$0xf]
  %v148 = vld [vmem:[%s1 + $0x1a4] sm:$0xf]
  %v149 = vld [vmem:[%s1 + $0x1a8] sm:$0xf]
  %v150 = vld [vmem:[%s1 + $0x1ac] sm:$0xf]
  %v151 = vld [vmem:[%s1 + $0x1b0] sm:$0xf]
  %v152 = vld [vmem:[%s1 + $0x1b4] sm:$0xf]
  %v153 = vld [vmem:[%s1 + $0x1b8] sm:$0xf]
  %v154 = vld [vmem:[%s1 + $0x1bc] sm:$0xf]
  %v155 = vld [vmem:[%s1 + $0x1c0] sm:$0xf]
  %v156 = vld [vmem:[%s1 + $0x1c4] sm:$0xf]
  %v157 = vld [vmem:[%s1 + $0x1c8] sm:$0xf]
  %v158 = vld [vmem:[%s1 + $0x1cc] sm:$0xf]
  %v159 = vld [vmem:[%s1 + $0x1d0] sm:$0xf]
  %v160 = vld [vmem:[%s1 + $0x1d4] sm:$0xf]
  %v161 = vld [vmem:[%s1 + $0x1d8] sm:$0xf]
  %v162 = vld [vmem:[%s1 + $0x1dc] sm:$0xf]
  %v163 = vld [vmem:[%s1 + $0x1e0] sm:$0xf]
  %v164 = vld [vmem:[%s1 + $0x1e4] sm:$0xf]
  %v165 = vld [vmem:[%s1 + $0x1e8] sm:$0xf]
  %v166 = vld [vmem:[%s1 + $0x1ec] sm:$0xf]
  %v167 = vld [vmem:[%s1 + $0x1f0] sm:$0xf]
  %v168 = vld [vmem:[%s1 + $0x1f4] sm:$0xf]
  %v169 = vld [vmem:[%s1 + $0x1f8] sm:$0xf]
  %v170 = vld [vmem:[%s1 + $0x1fc] sm:$0xf]
  %v171 = vld [vmem:[%s2] sm:$0x1]
  %v173 = vlaneseq
  %v174 = vshrl.u32 %v173, 7
  %v175 = vsub.s32 0, %v174
  %v176 = vrot.slane %v171, %v175
  %v186 = vunpack.c.l.b16 %v35
  %v187 = vunpack.c.h.b16 %v35
  %v188 = vunpack.c.l.b16 %v36
  %v189 = vunpack.c.h.b16 %v36
  %v190 = vunpack.c.l.b16 %v37
  %v191 = vunpack.c.h.b16 %v37
  %v192 = vunpack.c.l.b16 %v38
  %v193 = vunpack.c.h.b16 %v38
  %v194 = vunpack.c.l.b16 %v39
  %v195 = vunpack.c.h.b16 %v39
  %v196 = vunpack.c.l.b16 %v40
  %v197 = vunpack.c.h.b16 %v40
  %v198 = vunpack.c.l.b16 %v41
  %v199 = vunpack.c.h.b16 %v41
  %v200 = vunpack.c.l.b16 %v42
  %v201 = vunpack.c.h.b16 %v42
  %v202 = vpack.c.b16 %v194, %v186
  %v203 = vpack.c.b16 %v195, %v187
  %v204 = vpack.c.b16 %v196, %v188
  %v205 = vpack.c.b16 %v197, %v189
  %v206 = vpack.c.b16 %v198, %v190
  %v207 = vpack.c.b16 %v199, %v191
  %v208 = vpack.c.b16 %v200, %v192
  %v209 = vpack.c.b16 %v201, %v193
  %v346 = vunpack.c.l.b16 %v43
  %v347 = vunpack.c.l.b16 %v44
  %v348 = vunpack.c.l.b16 %v45
  %v349 = vunpack.c.l.b16 %v46
  %v350 = vunpack.c.l.b16 %v47
  %v351 = vunpack.c.l.b16 %v48
  %v352 = vunpack.c.l.b16 %v49
  %v353 = vunpack.c.l.b16 %v50
  %v354 = vunpack.c.l.b16 %v51
  %v355 = vunpack.c.l.b16 %v52
  %v356 = vunpack.c.l.b16 %v53
  %v357 = vunpack.c.l.b16 %v54
  %v358 = vunpack.c.l.b16 %v55
  %v359 = vunpack.c.l.b16 %v56
  %v360 = vunpack.c.l.b16 %v57
  %v361 = vunpack.c.l.b16 %v58
  %v362 = vunpack.c.l.b16 %v59
  %v363 = vunpack.c.l.b16 %v60
  %v364 = vunpack.c.l.b16 %v61
  %v365 = vunpack.c.l.b16 %v62
  %v366 = vunpack.c.l.b16 %v63
  %v367 = vunpack.c.l.b16 %v64
  %v368 = vunpack.c.l.b16 %v65
  %v369 = vunpack.c.l.b16 %v66
  %v370 = vunpack.c.l.b16 %v67
  %v371 = vunpack.c.l.b16 %v68
  %v372 = vunpack.c.l.b16 %v69
  %v373 = vunpack.c.l.b16 %v70
  %v374 = vunpack.c.l.b16 %v71
  %v375 = vunpack.c.l.b16 %v72
  %v376 = vunpack.c.l.b16 %v73
  %v377 = vunpack.c.l.b16 %v74
  %v378 = vunpack.c.l.b16 %v75
  %v379 = vunpack.c.l.b16 %v76
  %v380 = vunpack.c.l.b16 %v77
  %v381 = vunpack.c.l.b16 %v78
  %v382 = vunpack.c.l.b16 %v79
  %v383 = vunpack.c.l.b16 %v80
  %v384 = vunpack.c.l.b16 %v81
  %v385 = vunpack.c.l.b16 %v82
  %v386 = vunpack.c.l.b16 %v83
  %v387 = vunpack.c.l.b16 %v84
  %v388 = vunpack.c.l.b16 %v85
  %v389 = vunpack.c.l.b16 %v86
  %v390 = vunpack.c.l.b16 %v87
  %v391 = vunpack.c.l.b16 %v88
  %v392 = vunpack.c.l.b16 %v89
  %v393 = vunpack.c.l.b16 %v90
  %v394 = vunpack.c.l.b16 %v91
  %v395 = vunpack.c.l.b16 %v92
  %v396 = vunpack.c.l.b16 %v93
  %v397 = vunpack.c.l.b16 %v94
  %v398 = vunpack.c.l.b16 %v95
  %v399 = vunpack.c.l.b16 %v96
  %v400 = vunpack.c.l.b16 %v97
  %v401 = vunpack.c.l.b16 %v98
  %v402 = vunpack.c.l.b16 %v99
  %v403 = vunpack.c.l.b16 %v100
  %v404 = vunpack.c.l.b16 %v101
  %v405 = vunpack.c.l.b16 %v102
  %v406 = vunpack.c.l.b16 %v103
  %v407 = vunpack.c.l.b16 %v104
  %v408 = vunpack.c.l.b16 %v105
  %v409 = vunpack.c.l.b16 %v106
  %v410 = vunpack.c.l.b16 %v107
  %v411 = vunpack.c.l.b16 %v108
  %v412 = vunpack.c.l.b16 %v109
  %v413 = vunpack.c.l.b16 %v110
  %v414 = vunpack.c.l.b16 %v111
  %v415 = vunpack.c.l.b16 %v112
  %v416 = vunpack.c.l.b16 %v113
  %v417 = vunpack.c.l.b16 %v114
  %v418 = vunpack.c.l.b16 %v115
  %v419 = vunpack.c.l.b16 %v116
  %v420 = vunpack.c.l.b16 %v117
  %v421 = vunpack.c.l.b16 %v118
  %v422 = vunpack.c.l.b16 %v119
  %v423 = vunpack.c.l.b16 %v120
  %v424 = vunpack.c.l.b16 %v121
  %v425 = vunpack.c.l.b16 %v122
  %v426 = vunpack.c.l.b16 %v123
  %v427 = vunpack.c.l.b16 %v124
  %v428 = vunpack.c.l.b16 %v125
  %v429 = vunpack.c.l.b16 %v126
  %v430 = vunpack.c.l.b16 %v127
  %v431 = vunpack.c.l.b16 %v128
  %v432 = vunpack.c.l.b16 %v129
  %v433 = vunpack.c.l.b16 %v130
  %v434 = vunpack.c.l.b16 %v131
  %v435 = vunpack.c.l.b16 %v132
  %v436 = vunpack.c.l.b16 %v133
  %v437 = vunpack.c.l.b16 %v134
  %v438 = vunpack.c.l.b16 %v135
  %v439 = vunpack.c.l.b16 %v136
  %v440 = vunpack.c.l.b16 %v137
  %v441 = vunpack.c.l.b16 %v138
  %v442 = vunpack.c.l.b16 %v139
  %v443 = vunpack.c.l.b16 %v140
  %v444 = vunpack.c.l.b16 %v141
  %v445 = vunpack.c.l.b16 %v142
  %v446 = vunpack.c.l.b16 %v143
  %v447 = vunpack.c.l.b16 %v144
  %v448 = vunpack.c.l.b16 %v145
  %v449 = vunpack.c.l.b16 %v146
  %v450 = vunpack.c.l.b16 %v147
  %v451 = vunpack.c.l.b16 %v148
  %v452 = vunpack.c.l.b16 %v149
  %v453 = vunpack.c.l.b16 %v150
  %v454 = vunpack.c.l.b16 %v151
  %v455 = vunpack.c.l.b16 %v152
  %v456 = vunpack.c.l.b16 %v153
  %v457 = vunpack.c.l.b16 %v154
  %v458 = vunpack.c.l.b16 %v155
  %v459 = vunpack.c.l.b16 %v156
  %v460 = vunpack.c.l.b16 %v157
  %v461 = vunpack.c.l.b16 %v158
  %v462 = vunpack.c.l.b16 %v159
  %v463 = vunpack.c.l.b16 %v160
  %v464 = vunpack.c.l.b16 %v161
  %v465 = vunpack.c.l.b16 %v162
  %v466 = vunpack.c.l.b16 %v163
  %v467 = vunpack.c.l.b16 %v164
  %v468 = vunpack.c.l.b16 %v165
  %v469 = vunpack.c.l.b16 %v166
  %v470 = vunpack.c.l.b16 %v167
  %v471 = vunpack.c.l.b16 %v168
  %v472 = vunpack.c.l.b16 %v169
  %v473 = vunpack.c.l.b16 %v170
  %v474 = vpack.c.b16 %v347, %v346
  %v475 = vpack.c.b16 %v349, %v348
  %v476 = vpack.c.b16 %v351, %v350
  %v477 = vpack.c.b16 %v353, %v352
  %v478 = vpack.c.b16 %v355, %v354
  %v479 = vpack.c.b16 %v357, %v356
  %v480 = vpack.c.b16 %v359, %v358
  %v481 = vpack.c.b16 %v361, %v360
  %v482 = vpack.c.b16 %v363, %v362
  %v483 = vpack.c.b16 %v365, %v364
  %v484 = vpack.c.b16 %v367, %v366
  %v485 = vpack.c.b16 %v369, %v368
  %v486 = vpack.c.b16 %v371, %v370
  %v487 = vpack.c.b16 %v373, %v372
  %v488 = vpack.c.b16 %v375, %v374
  %v489 = vpack.c.b16 %v377, %v376
  %v490 = vpack.c.b16 %v379, %v378
  %v491 = vpack.c.b16 %v381, %v380
  %v492 = vpack.c.b16 %v383, %v382
  %v493 = vpack.c.b16 %v385, %v384
  %v494 = vpack.c.b16 %v387, %v386
  %v495 = vpack.c.b16 %v389, %v388
  %v496 = vpack.c.b16 %v391, %v390
  %v497 = vpack.c.b16 %v393, %v392
  %v498 = vpack.c.b16 %v395, %v394
  %v499 = vpack.c.b16 %v397, %v396
  %v500 = vpack.c.b16 %v399, %v398
  %v501 = vpack.c.b16 %v401, %v400
  %v502 = vpack.c.b16 %v403, %v402
  %v503 = vpack.c.b16 %v405, %v404
  %v504 = vpack.c.b16 %v407, %v406
  %v505 = vpack.c.b16 %v409, %v408
  %v506 = vpack.c.b16 %v411, %v410
  %v507 = vpack.c.b16 %v413, %v412
  %v508 = vpack.c.b16 %v415, %v414
  %v509 = vpack.c.b16 %v417, %v416
  %v510 = vpack.c.b16 %v419, %v418
  %v511 = vpack.c.b16 %v421, %v420
  %v512 = vpack.c.b16 %v423, %v422
  %v513 = vpack.c.b16 %v425, %v424
  %v514 = vpack.c.b16 %v427, %v426
  %v515 = vpack.c.b16 %v429, %v428
  %v516 = vpack.c.b16 %v431, %v430
  %v517 = vpack.c.b16 %v433, %v432
  %v518 = vpack.c.b16 %v435, %v434
  %v519 = vpack.c.b16 %v437, %v436
  %v520 = vpack.c.b16 %v439, %v438
  %v521 = vpack.c.b16 %v441, %v440
  %v522 = vpack.c.b16 %v443, %v442
  %v523 = vpack.c.b16 %v445, %v444
  %v524 = vpack.c.b16 %v447, %v446
  %v525 = vpack.c.b16 %v449, %v448
  %v526 = vpack.c.b16 %v451, %v450
  %v527 = vpack.c.b16 %v453, %v452
  %v528 = vpack.c.b16 %v455, %v454
  %v529 = vpack.c.b16 %v457, %v456
  %v530 = vpack.c.b16 %v459, %v458
  %v531 = vpack.c.b16 %v461, %v460
  %v532 = vpack.c.b16 %v463, %v462
  %v533 = vpack.c.b16 %v465, %v464
  %v534 = vpack.c.b16 %v467, %v466
  %v535 = vpack.c.b16 %v469, %v468
  %v536 = vpack.c.b16 %v471, %v470
  %v537 = vpack.c.b16 %v473, %v472
  %602 = vmatprep.subr.bf16.mxu0 0
  %603 = vmatpush1.bf16.msra.mxu0 %v474
  %604 = vmatprep.subr.bf16.mxu0 0
  %605 = vmatpush1.bf16.msra.mxu0 %v475
  %606 = vmatprep.subr.bf16.mxu0 0
  %607 = vmatpush1.bf16.msra.mxu0 %v476
  %608 = vmatprep.subr.bf16.mxu0 0
  %609 = vmatpush1.bf16.msra.mxu0 %v477
  %610 = vmatprep.subr.bf16.mxu0 0
  %611 = vmatpush1.bf16.msra.mxu0 %v478
  %612 = vmatprep.subr.bf16.mxu0 0
  %613 = vmatpush1.bf16.msra.mxu0 %v479
  %614 = vmatprep.subr.bf16.mxu0 0
  %615 = vmatpush1.bf16.msra.mxu0 %v480
  %616 = vmatprep.subr.bf16.mxu0 0
  %617 = vmatpush1.bf16.msra.mxu0 %v481
  %618 = vmatprep.subr.bf16.mxu0 0
  %619 = vmatpush1.bf16.msra.mxu0 %v482
  %620 = vmatprep.subr.bf16.mxu0 0
  %621 = vmatpush1.bf16.msra.mxu0 %v483
  %622 = vmatprep.subr.bf16.mxu0 0
  %623 = vmatpush1.bf16.msra.mxu0 %v484
  %624 = vmatprep.subr.bf16.mxu0 0
  %625 = vmatpush1.bf16.msra.mxu0 %v485
  %626 = vmatprep.subr.bf16.mxu0 0
  %627 = vmatpush1.bf16.msra.mxu0 %v486
  %628 = vmatprep.subr.bf16.mxu0 0
  %629 = vmatpush1.bf16.msra.mxu0 %v487
  %630 = vmatprep.subr.bf16.mxu0 0
  %631 = vmatpush1.bf16.msra.mxu0 %v488
  %632 = vmatprep.subr.bf16.mxu0 0
  %633 = vmatpush1.bf16.msra.mxu0 %v489
  %634 = vmatprep.mubr.bf16.mxu0 %v203
  %635 = vmatmul.mubr.bf16.gmra.mrb[0].mxu0 %v202
  %v636 = vpop.f32.mrb[0].mxu0
  %v637 = vadd.f32 %v176, %v636
  %v638 = vpop.f32.mrb[0].mxu0
  %v639 = vpop.f32.mrb[0].mxu0
  %v640 = vadd.f32 %v176, %v639
  %v641 = vpop.f32.mrb[0].mxu0
  %642 = vdwg.mxu0
  %643 = vmatprep.subr.bf16.mxu0 0
  %644 = vmatpush1.bf16.msra.mxu0 %v490
  %645 = vmatprep.subr.bf16.mxu0 0
  %646 = vmatpush1.bf16.msra.mxu0 %v491
  %647 = vmatprep.subr.bf16.mxu0 0
  %648 = vmatpush1.bf16.msra.mxu0 %v492
  %649 = vmatprep.subr.bf16.mxu0 0
  %650 = vmatpush1.bf16.msra.mxu0 %v493
  %651 = vmatprep.subr.bf16.mxu0 0
  %652 = vmatpush1.bf16.msra.mxu0 %v494
  %653 = vmatprep.subr.bf16.mxu0 0
  %654 = vmatpush1.bf16.msra.mxu0 %v495
  %655 = vmatprep.subr.bf16.mxu0 0
  %656 = vmatpush1.bf16.msra.mxu0 %v496
  %657 = vmatprep.subr.bf16.mxu0 0
  %658 = vmatpush1.bf16.msra.mxu0 %v497
  %659 = vmatprep.subr.bf16.mxu0 0
  %660 = vmatpush1.bf16.msra.mxu0 %v498
  %661 = vmatprep.subr.bf16.mxu0 0
  %662 = vmatpush1.bf16.msra.mxu0 %v499
  %663 = vmatprep.subr.bf16.mxu0 0
  %664 = vmatpush1.bf16.msra.mxu0 %v500
  %665 = vmatprep.subr.bf16.mxu0 0
  %666 = vmatpush1.bf16.msra.mxu0 %v501
  %667 = vmatprep.subr.bf16.mxu0 0
  %668 = vmatpush1.bf16.msra.mxu0 %v502
  %669 = vmatprep.subr.bf16.mxu0 0
  %670 = vmatpush1.bf16.msra.mxu0 %v503
  %671 = vmatprep.subr.bf16.mxu0 0
  %672 = vmatpush1.bf16.msra.mxu0 %v504
  %673 = vmatprep.subr.bf16.mxu0 0
  %674 = vmatpush1.bf16.msra.mxu0 %v505
  %675 = vmatprep.mubr.bf16.mxu0 %v205
  %676 = vmatmul.mubr.bf16.gmra.mrb[0].mxu0 %v204
  %v677 = vpop.f32.mrb[0].mxu0
  %v678 = vadd.f32 %v637, %v677
  %v679 = vpop.f32.mrb[0].mxu0
  %v680 = vpop.f32.mrb[0].mxu0
  %v681 = vadd.f32 %v640, %v680
  %v682 = vpop.f32.mrb[0].mxu0
  %683 = vdwg.mxu0
  %684 = vmatprep.subr.bf16.mxu0 0
  %685 = vmatpush1.bf16.msra.mxu0 %v506
  %686 = vmatprep.subr.bf16.mxu0 0
  %687 = vmatpush1.bf16.msra.mxu0 %v507
  %688 = vmatprep.subr.bf16.mxu0 0
  %689 = vmatpush1.bf16.msra.mxu0 %v508
  %690 = vmatprep.subr.bf16.mxu0 0
  %691 = vmatpush1.bf16.msra.mxu0 %v509
  %692 = vmatprep.subr.bf16.mxu0 0
  %693 = vmatpush1.bf16.msra.mxu0 %v510
  %694 = vmatprep.subr.bf16.mxu0 0
  %695 = vmatpush1.bf16.msra.mxu0 %v511
  %696 = vmatprep.subr.bf16.mxu0 0
  %697 = vmatpush1.bf16.msra.mxu0 %v512
  %698 = vmatprep.subr.bf16.mxu0 0
  %699 = vmatpush1.bf16.msra.mxu0 %v513
  %700 = vmatprep.subr.bf16.mxu0 0
  %701 = vmatpush1.bf16.msra.mxu0 %v514
  %702 = vmatprep.subr.bf16.mxu0 0
  %703 = vmatpush1.bf16.msra.mxu0 %v515
  %704 = vmatprep.subr.bf16.mxu0 0
  %705 = vmatpush1.bf16.msra.mxu0 %v516
  %706 = vmatprep.subr.bf16.mxu0 0
  %707 = vmatpush1.bf16.msra.mxu0 %v517
  %708 = vmatprep.subr.bf16.mxu0 0
  %709 = vmatpush1.bf16.msra.mxu0 %v518
  %710 = vmatprep.subr.bf16.mxu0 0
  %711 = vmatpush1.bf16.msra.mxu0 %v519
  %712 = vmatprep.subr.bf16.mxu0 0
  %713 = vmatpush1.bf16.msra.mxu0 %v520
  %714 = vmatprep.subr.bf16.mxu0 0
  %715 = vmatpush1.bf16.msra.mxu0 %v521
  %716 = vmatprep.mubr.bf16.mxu0 %v207
  %717 = vmatmul.mubr.bf16.gmra.mrb[0].mxu0 %v206
  %v718 = vpop.f32.mrb[0].mxu0
  %v719 = vadd.f32 %v678, %v718
  %v720 = vpop.f32.mrb[0].mxu0
  %v721 = vpop.f32.mrb[0].mxu0
  %v722 = vadd.f32 %v681, %v721
  %v723 = vpop.f32.mrb[0].mxu0
  %724 = vdwg.mxu0
  %725 = vmatprep.subr.bf16.mxu0 0
  %726 = vmatpush1.bf16.msra.mxu0 %v522
  %727 = vmatprep.subr.bf16.mxu0 0
  %728 = vmatpush1.bf16.msra.mxu0 %v523
  %729 = vmatprep.subr.bf16.mxu0 0
  %730 = vmatpush1.bf16.msra.mxu0 %v524
  %731 = vmatprep.subr.bf16.mxu0 0
  %732 = vmatpush1.bf16.msra.mxu0 %v525
  %733 = vmatprep.subr.bf16.mxu0 0
  %734 = vmatpush1.bf16.msra.mxu0 %v526
  %735 = vmatprep.subr.bf16.mxu0 0
  %736 = vmatpush1.bf16.msra.mxu0 %v527
  %737 = vmatprep.subr.bf16.mxu0 0
  %738 = vmatpush1.bf16.msra.mxu0 %v528
  %739 = vmatprep.subr.bf16.mxu0 0
  %740 = vmatpush1.bf16.msra.mxu0 %v529
  %741 = vmatprep.subr.bf16.mxu0 0
  %742 = vmatpush1.bf16.msra.mxu0 %v530
  %743 = vmatprep.subr.bf16.mxu0 0
  %744 = vmatpush1.bf16.msra.mxu0 %v531
  %745 = vmatprep.subr.bf16.mxu0 0
  %746 = vmatpush1.bf16.msra.mxu0 %v532
  %747 = vmatprep.subr.bf16.mxu0 0
  %748 = vmatpush1.bf16.msra.mxu0 %v533
  %749 = vmatprep.subr.bf16.mxu0 0
  %750 = vmatpush1.bf16.msra.mxu0 %v534
  %751 = vmatprep.subr.bf16.mxu0 0
  %752 = vmatpush1.bf16.msra.mxu0 %v535
  %753 = vmatprep.subr.bf16.mxu0 0
  %754 = vmatpush1.bf16.msra.mxu0 %v536
  %755 = vmatprep.subr.bf16.mxu0 0
  %756 = vmatpush1.bf16.msra.mxu0 %v537
  %757 = vmatprep.mubr.bf16.mxu0 %v209
  %758 = vmatmul.mubr.bf16.gmra.mrb[0].mxu0 %v208
  %v759 = vpop.f32.mrb[0].mxu0
  %v760 = vadd.f32 %v719, %v759
  %v761 = vpop.f32.mrb[0].mxu0
  %v762 = vpop.f32.mrb[0].mxu0
  %v763 = vadd.f32 %v722, %v762
  %v764 = vpop.f32.mrb[0].mxu0
  %765 = vdwg.mxu0
  %v766 = vmax.f32 %v760, 0.0
  %v767 = vmax.f32 %v763, 0.0
  %v768 = vpack.c.bf16 %v767, %v766
  %v769 = vld [vmem:[%s3] sm:$0xf]
  %v770 = vld [vmem:[%s3 + $0x4] sm:$0xf]
  %v771 = vld [vmem:[%s3 + $0x8] sm:$0xf]
  %v772 = vld [vmem:[%s3 + $0xc] sm:$0xf]
  %v773 = vld [vmem:[%s3 + $0x10] sm:$0xf]
  %v774 = vld [vmem:[%s3 + $0x14] sm:$0xf]
  %v775 = vld [vmem:[%s3 + $0x18] sm:$0xf]
  %v776 = vld [vmem:[%s3 + $0x1c] sm:$0xf]
  %v777 = vld [vmem:[%s4] sm:$0x1]
  %v779 = vlaneseq
  %v780 = vshrl.u32 %v779, 7
  %v781 = vsub.s32 0, %v780
  %v782 = vrot.slane %v777, %v781
  %v792 = vunpack.c.l.b16 %v769
  %v793 = vunpack.c.l.b16 %v770
  %v794 = vunpack.c.l.b16 %v771
  %v795 = vunpack.c.l.b16 %v772
  %v796 = vunpack.c.l.b16 %v773
  %v797 = vunpack.c.l.b16 %v774
  %v798 = vunpack.c.l.b16 %v775
  %v799 = vunpack.c.l.b16 %v776
  %v800 = vpack.c.b16 %v793, %v792
  %v801 = vpack.c.b16 %v795, %v794
  %v802 = vpack.c.b16 %v797, %v796
  %v803 = vpack.c.b16 %v799, %v798
  %vm808 = vcmask 523264
  %v810 = vsel %vm808, %v768, 0
  %812 = vmatprep.subr.bf16.mxu0 0
  %813 = vmatpush1.bf16.msra.mxu0 %v800
  %814 = vmatprep.subr.bf16.mxu0 0
  %815 = vmatpush1.bf16.msra.mxu0 %v801
  %816 = vmatprep.subr.bf16.mxu0 0
  %817 = vmatpush1.bf16.msra.mxu0 %v802
  %818 = vmatprep.subr.bf16.mxu0 0
  %819 = vmatpush1.bf16.msra.mxu0 %v803
  %820 = vmatprep.subr.bf16.mxu0 0
  %821 = vmatpush1.bf16.msra.mxu0 0
  %822 = vmatprep.subr.bf16.mxu0 0
  %823 = vmatpush1.bf16.msra.mxu0 0
  %824 = vmatprep.subr.bf16.mxu0 0
  %825 = vmatpush1.bf16.msra.mxu0 0
  %826 = vmatprep.subr.bf16.mxu0 0
  %827 = vmatpush1.bf16.msra.mxu0 0
  %828 = vmatprep.subr.bf16.mxu0 0
  %829 = vmatpush1.bf16.msra.mxu0 0
  %830 = vmatprep.subr.bf16.mxu0 0
  %831 = vmatpush1.bf16.msra.mxu0 0
  %832 = vmatprep.subr.bf16.mxu0 0
  %833 = vmatpush1.bf16.msra.mxu0 0
  %834 = vmatprep.subr.bf16.mxu0 0
  %835 = vmatpush1.bf16.msra.mxu0 0
  %836 = vmatprep.subr.bf16.mxu0 0
  %837 = vmatpush1.bf16.msra.mxu0 0
  %838 = vmatprep.subr.bf16.mxu0 0
  %839 = vmatpush1.bf16.msra.mxu0 0
  %840 = vmatprep.subr.bf16.mxu0 0
  %841 = vmatpush1.bf16.msra.mxu0 0
  %842 = vmatprep.subr.bf16.mxu0 0
  %843 = vmatpush1.bf16.msra.mxu0 0
  %844 = vmatprep.mubr.bf16.mxu0 0
  %845 = vmatmul.mubr.bf16.gmra.mrb[0].mxu0 %v810
  %v846 = vpop.f32.mrb[0].mxu0
  %v847 = vadd.f32 %v782, %v846
  %v848 = vpop.f32.mrb[0].mxu0
  %v849 = vpop.f32.mrb[0].mxu0
  %v850 = vadd.f32 %v782, %v849
  %v851 = vpop.f32.mrb[0].mxu0
  %852 = vdwg.mxu0
  %vm853 = vcmask 130048
  %854 = vst.msk [vmem:[%s9] sm:$0xff] %vm853, %v847
  %855 = vst.msk [vmem:[%s9 + $0x8] sm:$0xff] %vm853, %v850
  %v856 = vpack.c.bf16 %v850, %v847
  %v857 = vld [vmem:[%s5] sm:$0xf]
  %v858 = vld [vmem:[%s5 + $0x4] sm:$0xf]
  %v859 = vld [vmem:[%s6] sm:$0x1]
  %v861 = vlaneseq
  %v862 = vshrl.u32 %v861, 7
  %v863 = vsub.s32 0, %v862
  %v864 = vrot.slane %v859, %v863
  %v868 = vunpack.c.l.b16 %v857
  %v869 = vunpack.c.l.b16 %v858
  %v870 = vpack.c.b16 %v869, %v868
  %v873 = vsel %vm853, %v856, 0
  %875 = vmatprep.subr.bf16.mxu0 0
  %876 = vmatpush1.bf16.msra.mxu0 %v870
  %877 = vmatprep.subr.bf16.mxu0 0
  %878 = vmatpush1.bf16.msra.mxu0 0
  %879 = vmatprep.subr.bf16.mxu0 0
  %880 = vmatpush1.bf16.msra.mxu0 0
  %881 = vmatprep.subr.bf16.mxu0 0
  %882 = vmatpush1.bf16.msra.mxu0 0
  %883 = vmatprep.subr.bf16.mxu0 0
  %884 = vmatpush1.bf16.msra.mxu0 0
  %885 = vmatprep.subr.bf16.mxu0 0
  %886 = vmatpush1.bf16.msra.mxu0 0
  %887 = vmatprep.subr.bf16.mxu0 0
  %888 = vmatpush1.bf16.msra.mxu0 0
  %889 = vmatprep.subr.bf16.mxu0 0
  %890 = vmatpush1.bf16.msra.mxu0 0
  %891 = vmatprep.subr.bf16.mxu0 0
  %892 = vmatpush1.bf16.msra.mxu0 0
  %893 = vmatprep.subr.bf16.mxu0 0
  %894 = vmatpush1.bf16.msra.mxu0 0
  %895 = vmatprep.subr.bf16.mxu0 0
  %896 = vmatpush1.bf16.msra.mxu0 0
  %897 = vmatprep.subr.bf16.mxu0 0
  %898 = vmatpush1.bf16.msra.mxu0 0
  %899 = vmatprep.subr.bf16.mxu0 0
  %900 = vmatpush1.bf16.msra.mxu0 0
  %901 = vmatprep.subr.bf16.mxu0 0
  %902 = vmatpush1.bf16.msra.mxu0 0
  %903 = vmatprep.subr.bf16.mxu0 0
  %904 = vmatpush1.bf16.msra.mxu0 0
  %905 = vmatprep.subr.bf16.mxu0 0
  %906 = vmatpush1.bf16.msra.mxu0 0
  %907 = vmatprep.mubr.bf16.mxu0 0
  %908 = vmatmul.mubr.bf16.gmra.mrb[0].mxu0 %v873
  %v909 = vpop.f32.mrb[0].mxu0
  %v910 = vadd.f32 %v864, %v909
  %v911 = vpop.f32.mrb[0].mxu0
  %v912 = vpop.f32.mrb[0].mxu0
  %v913 = vadd.f32 %v864, %v912
  %v914 = vpop.f32.mrb[0].mxu0
  %915 = vdwg.mxu0
  %v916 = vmax.f32 %v910, 0.0
  %v917 = vmax.f32 %v913, 0.0
  %v918 = vpack.c.bf16 %v917, %v916
  %v919 = vld [vmem:[%s7] sm:$0xff]
  %v920 = vld [vmem:[%s7 + $0x8] sm:$0xff]
  %v921 = vld [vmem:[%s7 + $0x10] sm:$0xff]
  %v922 = vld [vmem:[%s7 + $0x18] sm:$0xff]
  %v923 = vld [vmem:[%s7 + $0x20] sm:$0xff]
  %v924 = vld [vmem:[%s7 + $0x28] sm:$0xff]
  %v925 = vld [vmem:[%s7 + $0x30] sm:$0xff]
  %v926 = vld [vmem:[%s7 + $0x38] sm:$0xff]
  %v927 = vld [vmem:[%s7 + $0x40] sm:$0xff]
  %v928 = vld [vmem:[%s7 + $0x48] sm:$0xff]
  %v929 = vld [vmem:[%s7 + $0x50] sm:$0xff]
  %v930 = vld [vmem:[%s7 + $0x58] sm:$0xff]
  %v931 = vld [vmem:[%s7 + $0x60] sm:$0xff]
  %v932 = vld [vmem:[%s7 + $0x68] sm:$0xff]
  %v933 = vld [vmem:[%s7 + $0x70] sm:$0xff]
  %v934 = vld [vmem:[%s7 + $0x78] sm:$0xff]
  %v935 = vld [vmem:[%s7 + $0x80] sm:$0xff]
  %v936 = vld [vmem:[%s7 + $0x88] sm:$0xff]
  %v937 = vld [vmem:[%s7 + $0x90] sm:$0xff]
  %v938 = vld [vmem:[%s7 + $0x98] sm:$0xff]
  %v939 = vld [vmem:[%s7 + $0xa0] sm:$0xff]
  %v940 = vld [vmem:[%s7 + $0xa8] sm:$0xff]
  %v941 = vld [vmem:[%s7 + $0xb0] sm:$0xff]
  %v942 = vld [vmem:[%s7 + $0xb8] sm:$0xff]
  %v943 = vld [vmem:[%s7 + $0xc0] sm:$0xff]
  %v944 = vld [vmem:[%s7 + $0xc8] sm:$0xff]
  %v945 = vld [vmem:[%s7 + $0xd0] sm:$0xff]
  %v946 = vld [vmem:[%s7 + $0xd8] sm:$0xff]
  %v947 = vld [vmem:[%s7 + $0xe0] sm:$0xff]
  %v948 = vld [vmem:[%s7 + $0xe8] sm:$0xff]
  %v949 = vld [vmem:[%s7 + $0xf0] sm:$0xff]
  %v950 = vld [vmem:[%s7 + $0xf8] sm:$0xff]
  %v951 = vld [vmem:[%s8] sm:$0xff]
  %v953 = vlaneseq
  %v954 = vshrl.u32 %v953, 7
  %v955 = vsub.s32 0, %v954
  %v956 = vrot.slane %v951, %v955
  %v957 = vlaneseq
  %v958 = vshrl.u32 %v957, 7
  %v959 = vsub.s32 1, %v958
  %v960 = vrot.slane %v951, %v959
  %v961 = vlaneseq
  %v962 = vshrl.u32 %v961, 7
  %v963 = vsub.s32 2, %v962
  %v964 = vrot.slane %v951, %v963
  %v965 = vlaneseq
  %v966 = vshrl.u32 %v965, 7
  %v967 = vsub.s32 3, %v966
  %v968 = vrot.slane %v951, %v967
  %v969 = vlaneseq
  %v970 = vshrl.u32 %v969, 7
  %v971 = vsub.s32 4, %v970
  %v972 = vrot.slane %v951, %v971
  %v973 = vlaneseq
  %v974 = vshrl.u32 %v973, 7
  %v975 = vsub.s32 5, %v974
  %v976 = vrot.slane %v951, %v975
  %v977 = vlaneseq
  %v978 = vshrl.u32 %v977, 7
  %v979 = vsub.s32 6, %v978
  %v980 = vrot.slane %v951, %v979
  %v981 = vlaneseq
  %v982 = vshrl.u32 %v981, 7
  %v983 = vsub.s32 7, %v982
  %v984 = vrot.slane %v951, %v983
  %v1025 = vunpack.c.l.b16 %v919
  %v1026 = vunpack.c.h.b16 %v919
  %v1027 = vunpack.c.l.b16 %v920
  %v1028 = vunpack.c.h.b16 %v920
  %v1029 = vunpack.c.l.b16 %v921
  %v1030 = vunpack.c.h.b16 %v921
  %v1031 = vunpack.c.l.b16 %v922
  %v1032 = vunpack.c.h.b16 %v922
  %v1033 = vunpack.c.l.b16 %v923
  %v1034 = vunpack.c.h.b16 %v923
  %v1035 = vunpack.c.l.b16 %v924
  %v1036 = vunpack.c.h.b16 %v924
  %v1037 = vunpack.c.l.b16 %v925
  %v1038 = vunpack.c.h.b16 %v925
  %v1039 = vunpack.c.l.b16 %v926
  %v1040 = vunpack.c.h.b16 %v926
  %v1041 = vunpack.c.l.b16 %v927
  %v1042 = vunpack.c.h.b16 %v927
  %v1043 = vunpack.c.l.b16 %v928
  %v1044 = vunpack.c.h.b16 %v928
  %v1045 = vunpack.c.l.b16 %v929
  %v1046 = vunpack.c.h.b16 %v929
  %v1047 = vunpack.c.l.b16 %v930
  %v1048 = vunpack.c.h.b16 %v930
  %v1049 = vunpack.c.l.b16 %v931
  %v1050 = vunpack.c.h.b16 %v931
  %v1051 = vunpack.c.l.b16 %v932
  %v1052 = vunpack.c.h.b16 %v932
  %v1053 = vunpack.c.l.b16 %v933
  %v1054 = vunpack.c.h.b16 %v933
  %v1055 = vunpack.c.l.b16 %v934
  %v1056 = vunpack.c.h.b16 %v934
  %v1057 = vunpack.c.l.b16 %v935
  %v1058 = vunpack.c.h.b16 %v935
  %v1059 = vunpack.c.l.b16 %v936
  %v1060 = vunpack.c.h.b16 %v936
  %v1061 = vunpack.c.l.b16 %v937
  %v1062 = vunpack.c.h.b16 %v937
  %v1063 = vunpack.c.l.b16 %v938
  %v1064 = vunpack.c.h.b16 %v938
  %v1065 = vunpack.c.l.b16 %v939
  %v1066 = vunpack.c.h.b16 %v939
  %v1067 = vunpack.c.l.b16 %v940
  %v1068 = vunpack.c.h.b16 %v940
  %v1069 = vunpack.c.l.b16 %v941
  %v1070 = vunpack.c.h.b16 %v941
  %v1071 = vunpack.c.l.b16 %v942
  %v1072 = vunpack.c.h.b16 %v942
  %v1073 = vunpack.c.l.b16 %v943
  %v1074 = vunpack.c.h.b16 %v943
  %v1075 = vunpack.c.l.b16 %v944
  %v1076 = vunpack.c.h.b16 %v944
  %v1077 = vunpack.c.l.b16 %v945
  %v1078 = vunpack.c.h.b16 %v945
  %v1079 = vunpack.c.l.b16 %v946
  %v1080 = vunpack.c.h.b16 %v946
  %v1081 = vunpack.c.l.b16 %v947
  %v1082 = vunpack.c.h.b16 %v947
  %v1083 = vunpack.c.l.b16 %v948
  %v1084 = vunpack.c.h.b16 %v948
  %v1085 = vunpack.c.l.b16 %v949
  %v1086 = vunpack.c.h.b16 %v949
  %v1087 = vunpack.c.l.b16 %v950
  %v1088 = vunpack.c.h.b16 %v950
  %v1089 = vpack.c.b16 %v1033, %v1025
  %v1090 = vpack.c.b16 %v1034, %v1026
  %v1091 = vpack.c.b16 %v1035, %v1027
  %v1092 = vpack.c.b16 %v1036, %v1028
  %v1093 = vpack.c.b16 %v1037, %v1029
  %v1094 = vpack.c.b16 %v1038, %v1030
  %v1095 = vpack.c.b16 %v1039, %v1031
  %v1096 = vpack.c.b16 %v1040, %v1032
  %v1097 = vpack.c.b16 %v1049, %v1041
  %v1098 = vpack.c.b16 %v1050, %v1042
  %v1099 = vpack.c.b16 %v1051, %v1043
  %v1100 = vpack.c.b16 %v1052, %v1044
  %v1101 = vpack.c.b16 %v1053, %v1045
  %v1102 = vpack.c.b16 %v1054, %v1046
  %v1103 = vpack.c.b16 %v1055, %v1047
  %v1104 = vpack.c.b16 %v1056, %v1048
  %v1105 = vpack.c.b16 %v1065, %v1057
  %v1106 = vpack.c.b16 %v1066, %v1058
  %v1107 = vpack.c.b16 %v1067, %v1059
  %v1108 = vpack.c.b16 %v1068, %v1060
  %v1109 = vpack.c.b16 %v1069, %v1061
  %v1110 = vpack.c.b16 %v1070, %v1062
  %v1111 = vpack.c.b16 %v1071, %v1063
  %v1112 = vpack.c.b16 %v1072, %v1064
  %v1113 = vpack.c.b16 %v1081, %v1073
  %v1114 = vpack.c.b16 %v1082, %v1074
  %v1115 = vpack.c.b16 %v1083, %v1075
  %v1116 = vpack.c.b16 %v1084, %v1076
  %v1117 = vpack.c.b16 %v1085, %v1077
  %v1118 = vpack.c.b16 %v1086, %v1078
  %v1119 = vpack.c.b16 %v1087, %v1079
  %v1120 = vpack.c.b16 %v1088, %v1080
  %v1154 = vsel %vm808, %v918, 0
  %1156 = vmatprep.subr.bf16.mxu0 %v1090
  %1157 = vmatpush1.bf16.msra.mxu0 %v1089
  %1158 = vmatprep.subr.bf16.mxu0 %v1098
  %1159 = vmatpush1.bf16.msra.mxu0 %v1097
  %1160 = vmatprep.subr.bf16.mxu0 %v1106
  %1161 = vmatpush1.bf16.msra.mxu0 %v1105
  %1162 = vmatprep.subr.bf16.mxu0 %v1114
  %1163 = vmatpush1.bf16.msra.mxu0 %v1113
  %1164 = vmatprep.subr.bf16.mxu0 0
  %1165 = vmatpush1.bf16.msra.mxu0 0
  %1166 = vmatprep.subr.bf16.mxu0 0
  %1167 = vmatpush1.bf16.msra.mxu0 0
  %1168 = vmatprep.subr.bf16.mxu0 0
  %1169 = vmatpush1.bf16.msra.mxu0 0
  %1170 = vmatprep.subr.bf16.mxu0 0
  %1171 = vmatpush1.bf16.msra.mxu0 0
  %1172 = vmatprep.subr.bf16.mxu0 0
  %1173 = vmatpush1.bf16.msra.mxu0 0
  %1174 = vmatprep.subr.bf16.mxu0 0
  %1175 = vmatpush1.bf16.msra.mxu0 0
  %1176 = vmatprep.subr.bf16.mxu0 0
  %1177 = vmatpush1.bf16.msra.mxu0 0
  %1178 = vmatprep.subr.bf16.mxu0 0
  %1179 = vmatpush1.bf16.msra.mxu0 0
  %1180 = vmatprep.subr.bf16.mxu0 0
  %1181 = vmatpush1.bf16.msra.mxu0 0
  %1182 = vmatprep.subr.bf16.mxu0 0
  %1183 = vmatpush1.bf16.msra.mxu0 0
  %1184 = vmatprep.subr.bf16.mxu0 0
  %1185 = vmatpush1.bf16.msra.mxu0 0
  %1186 = vmatprep.subr.bf16.mxu0 0
  %1187 = vmatpush1.bf16.msra.mxu0 0
  %1188 = vmatprep.mubr.bf16.mxu0 0
  %1189 = vmatmul.mubr.bf16.gmra.mrb[0].mxu0 %v1154
  %v1190 = vpop.f32.mrb[0].mxu0
  %v1191 = vadd.f32 %v956, %v1190
  %v1192 = vpop.f32.mrb[0].mxu0
  %v1193 = vadd.f32 %v960, %v1192
  %v1194 = vpop.f32.mrb[0].mxu0
  %v1195 = vadd.f32 %v956, %v1194
  %v1196 = vpop.f32.mrb[0].mxu0
  %v1197 = vadd.f32 %v960, %v1196
  %1198 = vdwg.mxu0
  %1199 = vmatprep.subr.bf16.mxu0 %v1092
  %1200 = vmatpush1.bf16.msra.mxu0 %v1091
  %1201 = vmatprep.subr.bf16.mxu0 %v1100
  %1202 = vmatpush1.bf16.msra.mxu0 %v1099
  %1203 = vmatprep.subr.bf16.mxu0 %v1108
  %1204 = vmatpush1.bf16.msra.mxu0 %v1107
  %1205 = vmatprep.subr.bf16.mxu0 %v1116
  %1206 = vmatpush1.bf16.msra.mxu0 %v1115
  %1207 = vmatprep.subr.bf16.mxu0 0
  %1208 = vmatpush1.bf16.msra.mxu0 0
  %1209 = vmatprep.subr.bf16.mxu0 0
  %1210 = vmatpush1.bf16.msra.mxu0 0
  %1211 = vmatprep.subr.bf16.mxu0 0
  %1212 = vmatpush1.bf16.msra.mxu0 0
  %1213 = vmatprep.subr.bf16.mxu0 0
  %1214 = vmatpush1.bf16.msra.mxu0 0
  %1215 = vmatprep.subr.bf16.mxu0 0
  %1216 = vmatpush1.bf16.msra.mxu0 0
  %1217 = vmatprep.subr.bf16.mxu0 0
  %1218 = vmatpush1.bf16.msra.mxu0 0
  %1219 = vmatprep.subr.bf16.mxu0 0
  %1220 = vmatpush1.bf16.msra.mxu0 0
  %1221 = vmatprep.subr.bf16.mxu0 0
  %1222 = vmatpush1.bf16.msra.mxu0 0
  %1223 = vmatprep.subr.bf16.mxu0 0
  %1224 = vmatpush1.bf16.msra.mxu0 0
  %1225 = vmatprep.subr.bf16.mxu0 0
  %1226 = vmatpush1.bf16.msra.mxu0 0
  %1227 = vmatprep.subr.bf16.mxu0 0
  %1228 = vmatpush1.bf16.msra.mxu0 0
  %1229 = vmatprep.subr.bf16.mxu0 0
  %1230 = vmatpush1.bf16.msra.mxu0 0
  %1231 = vmatprep.mubr.bf16.mxu0 0
  %1232 = vmatmul.mubr.bf16.gmra.mrb[0].mxu0 %v1154
  %v1233 = vpop.f32.mrb[0].mxu0
  %v1234 = vadd.f32 %v964, %v1233
  %v1235 = vpop.f32.mrb[0].mxu0
  %v1236 = vadd.f32 %v968, %v1235
  %v1237 = vpop.f32.mrb[0].mxu0
  %v1238 = vadd.f32 %v964, %v1237
  %v1239 = vpop.f32.mrb[0].mxu0
  %v1240 = vadd.f32 %v968, %v1239
  %1241 = vdwg.mxu0
  %1242 = vmatprep.subr.bf16.mxu0 %v1094
  %1243 = vmatpush1.bf16.msra.mxu0 %v1093
  %1244 = vmatprep.subr.bf16.mxu0 %v1102
  %1245 = vmatpush1.bf16.msra.mxu0 %v1101
  %1246 = vmatprep.subr.bf16.mxu0 %v1110
  %1247 = vmatpush1.bf16.msra.mxu0 %v1109
  %1248 = vmatprep.subr.bf16.mxu0 %v1118
  %1249 = vmatpush1.bf16.msra.mxu0 %v1117
  %1250 = vmatprep.subr.bf16.mxu0 0
  %1251 = vmatpush1.bf16.msra.mxu0 0
  %1252 = vmatprep.subr.bf16.mxu0 0
  %1253 = vmatpush1.bf16.msra.mxu0 0
  %1254 = vmatprep.subr.bf16.mxu0 0
  %1255 = vmatpush1.bf16.msra.mxu0 0
  %1256 = vmatprep.subr.bf16.mxu0 0
  %1257 = vmatpush1.bf16.msra.mxu0 0
  %1258 = vmatprep.subr.bf16.mxu0 0
  %1259 = vmatpush1.bf16.msra.mxu0 0
  %1260 = vmatprep.subr.bf16.mxu0 0
  %1261 = vmatpush1.bf16.msra.mxu0 0
  %1262 = vmatprep.subr.bf16.mxu0 0
  %1263 = vmatpush1.bf16.msra.mxu0 0
  %1264 = vmatprep.subr.bf16.mxu0 0
  %1265 = vmatpush1.bf16.msra.mxu0 0
  %1266 = vmatprep.subr.bf16.mxu0 0
  %1267 = vmatpush1.bf16.msra.mxu0 0
  %1268 = vmatprep.subr.bf16.mxu0 0
  %1269 = vmatpush1.bf16.msra.mxu0 0
  %1270 = vmatprep.subr.bf16.mxu0 0
  %1271 = vmatpush1.bf16.msra.mxu0 0
  %1272 = vmatprep.subr.bf16.mxu0 0
  %1273 = vmatpush1.bf16.msra.mxu0 0
  %1274 = vmatprep.mubr.bf16.mxu0 0
  %1275 = vmatmul.mubr.bf16.gmra.mrb[0].mxu0 %v1154
  %v1276 = vpop.f32.mrb[0].mxu0
  %v1277 = vadd.f32 %v972, %v1276
  %v1278 = vpop.f32.mrb[0].mxu0
  %v1279 = vadd.f32 %v976, %v1278
  %v1280 = vpop.f32.mrb[0].mxu0
  %v1281 = vadd.f32 %v972, %v1280
  %v1282 = vpop.f32.mrb[0].mxu0
  %v1283 = vadd.f32 %v976, %v1282
  %1284 = vdwg.mxu0
  %1285 = vmatprep.subr.bf16.mxu0 %v1096
  %1286 = vmatpush1.bf16.msra.mxu0 %v1095
  %1287 = vmatprep.subr.bf16.mxu0 %v1104
  %1288 = vmatpush1.bf16.msra.mxu0 %v1103
  %1289 = vmatprep.subr.bf16.mxu0 %v1112
  %1290 = vmatpush1.bf16.msra.mxu0 %v1111
  %1291 = vmatprep.subr.bf16.mxu0 %v1120
  %1292 = vmatpush1.bf16.msra.mxu0 %v1119
  %1293 = vmatprep.subr.bf16.mxu0 0
  %1294 = vmatpush1.bf16.msra.mxu0 0
  %1295 = vmatprep.subr.bf16.mxu0 0
  %1296 = vmatpush1.bf16.msra.mxu0 0
  %1297 = vmatprep.subr.bf16.mxu0 0
  %1298 = vmatpush1.bf16.msra.mxu0 0
  %1299 = vmatprep.subr.bf16.mxu0 0
  %1300 = vmatpush1.bf16.msra.mxu0 0
  %1301 = vmatprep.subr.bf16.mxu0 0
  %1302 = vmatpush1.bf16.msra.mxu0 0
  %1303 = vmatprep.subr.bf16.mxu0 0
  %1304 = vmatpush1.bf16.msra.mxu0 0
  %1305 = vmatprep.subr.bf16.mxu0 0
  %1306 = vmatpush1.bf16.msra.mxu0 0
  %1307 = vmatprep.subr.bf16.mxu0 0
  %1308 = vmatpush1.bf16.msra.mxu0 0
  %1309 = vmatprep.subr.bf16.mxu0 0
  %1310 = vmatpush1.bf16.msra.mxu0 0
  %1311 = vmatprep.subr.bf16.mxu0 0
  %1312 = vmatpush1.bf16.msra.mxu0 0
  %1313 = vmatprep.subr.bf16.mxu0 0
  %1314 = vmatpush1.bf16.msra.mxu0 0
  %1315 = vmatprep.subr.bf16.mxu0 0
  %1316 = vmatpush1.bf16.msra.mxu0 0
  %1317 = vmatprep.mubr.bf16.mxu0 0
  %1318 = vmatmul.mubr.bf16.gmra.mrb[0].mxu0 %v1154
  %v1319 = vpop.f32.mrb[0].mxu0
  %v1320 = vadd.f32 %v980, %v1319
  %v1321 = vpop.f32.mrb[0].mxu0
  %v1322 = vadd.f32 %v984, %v1321
  %v1323 = vpop.f32.mrb[0].mxu0
  %v1324 = vadd.f32 %v980, %v1323
  %v1325 = vpop.f32.mrb[0].mxu0
  %v1326 = vadd.f32 %v984, %v1325
  %1327 = vdwg.mxu0
  %1328 = vst [vmem:[%s10] sm:$0xff] %v1191
  %1329 = vst [vmem:[%s10 + $0x8] sm:$0xff] %v1193
  %1330 = vst [vmem:[%s10 + $0x10] sm:$0xff] %v1234
  %1331 = vst [vmem:[%s10 + $0x18] sm:$0xff] %v1236
  %1332 = vst [vmem:[%s10 + $0x20] sm:$0xff] %v1277
  %1333 = vst [vmem:[%s10 + $0x28] sm:$0xff] %v1279
  %1334 = vst [vmem:[%s10 + $0x30] sm:$0xff] %v1320
  %1335 = vst [vmem:[%s10 + $0x38] sm:$0xff] %v1322
  %1336 = vst [vmem:[%s10 + $0x40] sm:$0xff] %v1195
  %1337 = vst [vmem:[%s10 + $0x48] sm:$0xff] %v1197
  %1338 = vst [vmem:[%s10 + $0x50] sm:$0xff] %v1238
  %1339 = vst [vmem:[%s10 + $0x58] sm:$0xff] %v1240
  %1340 = vst [vmem:[%s10 + $0x60] sm:$0xff] %v1281
  %1341 = vst [vmem:[%s10 + $0x68] sm:$0xff] %v1283
  %1342 = vst [vmem:[%s10 + $0x70] sm:$0xff] %v1324
  %1343 = vst [vmem:[%s10 + $0x78] sm:$0xff] %v1326
  // Predicated region
  $region38: #{alphagan_forward.1} parent=0 // pred_check
    _
  $region39: #{alphagan_forward.1} parent=0 // pred_check_branch
    %1345 = sbr.rel (0) target = $region41
  $region40: #{alphagan_forward.1} parent=0 // pred_region
    _
  $region41: #{alphagan_forward.1} parent=0 // pred_fallthru
    _
  // Predicated region
  $region42: #{alphagan_forward.1} parent=0 // pred_check
    _
  $region43: #{alphagan_forward.1} parent=0 // pred_check_branch
    %1347 = sbr.rel (0) target = $region45
  $region44: #{alphagan_forward.1} parent=0 // pred_region
    _
  $region45: #{alphagan_forward.1} parent=0 // pred_fallthru
    _
  // Predicated region
  $region46: #{alphagan_forward.1} parent=0 // pred_check
    _
  $region47: #{alphagan_forward.1} parent=0 // pred_check_branch
    %1349 = sbr.rel (0) target = $region49
  $region48: #{alphagan_forward.1} parent=0 // pred_region
    _
  $region49: #{alphagan_forward.1} parent=0 // pred_fallthru
    _
  // Predicated region
  $region50: #{alphagan_forward.1} parent=0 // pred_check
    _
  $region51: #{alphagan_forward.1} parent=0 // pred_check_branch
    %1351 = sbr.rel (0) target = $region53
  $region52: #{alphagan_forward.1} parent=0 // pred_region
    _
  $region53: #{alphagan_forward.1} parent=0 // pred_fallthru
    _

</llo_original>
